<compile_context>
chip_gen: v6e
topology: v6e:2x2x1
jax: 0.10.0
libtpu: 0.0.40
codegen_flags: <defaults>
</compile_context>

<pallas_src>
import functools

import jax
import jax.numpy as jnp
from jax.experimental import pallas as pl
from jax.experimental.pallas import tpu as pltpu

EPS = 1e-6
LANES = 128

_CORE_PARALLEL = getattr(pltpu, "CORE_PARALLEL", "parallel")
_ARBITRARY = getattr(pltpu, "ARBITRARY", "arbitrary")


def _sublane_multiple(dtype) -> int:
    """Packed sublane multiple: 8 for 4-byte, 16 for 2-byte, 32 for 1-byte."""
    return max(8, 32 // jnp.dtype(dtype).itemsize)


@functools.lru_cache(maxsize=None)
def _chip_config():
    """(tm_cap, num_cores, vmem_limit_bytes) gated on the TPU generation."""
    try:
        kind = jax.devices()[0].device_kind.lower()
    except Exception:  # defensive: fall back to the conservative settings
        kind = ""
    if "v7" in kind:   # 2 TensorCores, 3.2 TB/s HBM, 32 MiB scoped VMEM default
        return 8192, 2, 32 * 1024 * 1024
    if "v6" in kind:   # 1 TensorCore, 32 MiB scoped-VMEM default
        return 8192, 1, 32 * 1024 * 1024
    # v5e / v5p / unknown: stay well inside the 16 MiB scoped-VMEM default.
    return 4096, 1, None


def _build_kernel(tm, ta, nb, ni, num_cores, rows_in_last):
    """Kernel accumulating per-core (ta, 128) partial sums of the error."""
    last_partial = rows_in_last != tm
    nb_full = nb - 1 if last_partial else nb

    def fold(e):
        # (tm, 128) -> (ta, 128): wide partial fold, final fold in the wrapper.
        return e.reshape(-1, ta, LANES).sum(axis=0)

    def kernel(x_ref, y_ref, o_ref):
        if num_cores == 1:
            i = pl.program_id(0)
            g = i
        else:
            p = pl.program_id(0)
            i = pl.program_id(1)
            g = p * ni + i

        @pl.when(i == 0)
        def _init():
            o_ref[...] = jnp.zeros_like(o_ref)

        # Subtract in the native dtype, upcast the difference once (saves a
        # VALU cast per element for bf16/f16 inputs).
        d = (x_ref[...] - y_ref[...]).astype(jnp.float32)
        err = jnp.sqrt(d * d + jnp.float32(EPS))

        @pl.when(g < nb_full)           # full, unmasked blocks
        def _full():
            o_ref[...] += fold(err)

        if last_partial:                # only generated when a partial block exists
            @pl.when(g == nb - 1)
            def _partial():
                row = jax.lax.broadcasted_iota(jnp.int32, (tm, LANES), 0)
                o_ref[...] += fold(jnp.where(row < rows_in_last, err, 0.0))

    return kernel


@jax.jit
def l1_charbonnier_loss(x, y):
    assert x.shape == y.shape, (x.shape, y.shape)
    n = x.size
    x_flat = x.reshape(-1)
    y_flat = y.reshape(-1)

    rows = n // LANES
    n_main = rows * LANES

    # Sub-row tail (< 128 elements): tiny fused plain-JAX reduction.
    if n_main < n:
        td = (x_flat[n_main:] - y_flat[n_main:]).astype(jnp.float32)
        tail = jnp.sum(jnp.sqrt(td * td + jnp.float32(EPS)))
    else:
        tail = jnp.float32(0.0)

    if rows == 0:
        # TODO(synk): inputs smaller than one 128-lane row skip the kernel.
        return tail

    x2d = x_flat[:n_main].reshape(rows, LANES)
    y2d = y_flat[:n_main].reshape(rows, LANES)

    sub = _sublane_multiple(x2d.dtype)
    if rows < sub:
        # Tiny input: pad (cheaply, < 8 KiB) up to one packed tile; the padded
        # rows are masked out in-kernel and contribute nothing.
        x2d = jnp.pad(x2d, ((0, sub - rows), (0, 0)))
        y2d = jnp.pad(y2d, ((0, sub - rows), (0, 0)))
    rows_padded = x2d.shape[0]

    tm_cap, num_cores, vmem_limit = _chip_config()
    if rows_padded >= 128:
        tm, ta = min(tm_cap, (rows_padded // 128) * 128), 128
    else:
        tm = (rows_padded // sub) * sub
        ta = tm

    nb = pl.cdiv(rows_padded, tm)            # total row blocks
    rows_in_last = rows - (nb - 1) * tm      # valid (unpadded) rows in last block
    num_cores = num_cores if nb >= 2 else 1
    ni = pl.cdiv(nb, num_cores)              # blocks per core (parity-free split)

    kernel = _build_kernel(tm, ta, nb, ni, num_cores, rows_in_last)

    if num_cores == 1:
        grid = (ni,)
        in_map = lambda i: (i, 0)
        out_map = lambda i: (0, 0)
        semantics = (_ARBITRARY,)
    else:
        grid = (num_cores, ni)
        # Clamp the (at most one) missing trailing block; its accumulation is
        # skipped in-kernel via pl.when.
        in_map = lambda p, i: (jnp.minimum(p * ni + i, nb - 1), 0)
        out_map = lambda p, i: (p, 0)
        semantics = (_CORE_PARALLEL, _ARBITRARY)

    partials = pl.pallas_call(
        kernel,
        out_shape=jax.ShapeDtypeStruct((num_cores * ta, LANES), jnp.float32),
        grid_spec=pltpu.PrefetchScalarGridSpec(
            num_scalar_prefetch=0,
            grid=grid,
            in_specs=[
                pl.BlockSpec((tm, LANES), in_map),
                pl.BlockSpec((tm, LANES), in_map),
            ],
            out_specs=pl.BlockSpec((ta, LANES), out_map),
        ),
        compiler_params=pltpu.CompilerParams(
            dimension_semantics=semantics,
            vmem_limit_bytes=vmem_limit,
        ),
    )(x2d, y2d)

    return jnp.sum(partials) + tail


if __name__ == "__main__":
    key = jax.random.PRNGKey(0)
    kx, ky = jax.random.split(key)
    # NCHW, matching the PyTorch convention for image-like inputs.
    x = jax.random.normal(kx, (2, 4, 16, 16), dtype=jnp.float32)
    y = jax.random.normal(ky, (2, 4, 16, 16), dtype=jnp.float32)

    loss = l1_charbonnier_loss(x, y)
    jax.block_until_ready(loss)

    ref = jnp.sum(jnp.sqrt((x - y) * (x - y) + EPS))
    assert jnp.allclose(loss, ref, rtol=1e-5, atol=1e-4), (loss, ref)

    # Odd-sized input: exercises the masked partial last block + sub-row tail.
    kx2, ky2 = jax.random.split(ky)
    x2 = jax.random.normal(kx2, (3, 5, 7, 11), dtype=jnp.float32)
    y2 = jax.random.normal(ky2, (3, 5, 7, 11), dtype=jnp.float32)
    loss2 = l1_charbonnier_loss(x2, y2)
    jax.block_until_ready(loss2)
    ref2 = jnp.sum(jnp.sqrt((x2 - y2) * (x2 - y2) + EPS))
    assert jnp.allclose(loss2, ref2, rtol=1e-5, atol=1e-4), (loss2, ref2)

    print("KERNEL_OK")
</pallas_src>

<mosaic_0001>
module attributes {stable_mosaic.version = 11 : i64} {
  func.func @kernel(%arg0: i32, %arg1: memref<16x128xf32, #tpu.memory_space<vmem>>, %arg2: memref<16x128xf32, #tpu.memory_space<vmem>>, %arg3: memref<16x128xf32, #tpu.memory_space<vmem>>) attributes {dimension_semantics = [#tpu.dimension_semantics<arbitrary>], iteration_bounds = array<i64: 1>, scalar_prefetch = 0 : i64, scratch_operands = 0 : i64, tpu.core_type = #tpu.core_type<tc>, window_params = [{transform_indices = @transform_0, window_bounds = array<i64: 16, 128>}, {transform_indices = @transform_1, window_bounds = array<i64: 16, 128>}, {pipeline_mode = #tpu.pipeline_mode<synchronous>, transform_indices = @transform_2, window_bounds = array<i64: 16, 128>}]} {
    %c0_i32 = arith.constant 0 : i32
    %0 = arith.cmpi eq, %arg0, %c0_i32 : i32
    %1 = arith.extui %0 : i1 to i32
    %c0_i32_0 = arith.constant 0 : i32
    %2 = arith.cmpi ne, %1, %c0_i32_0 : i32
    scf.if %2 {
      %cst_5 = arith.constant 0.000000e+00 : f32
      %13 = vector.broadcast %cst_5 : f32 to vector<16x128xf32>
      %c0_6 = arith.constant 0 : index
      %c0_7 = arith.constant 0 : index
      %14 = vector.load %arg3[%c0_6, %c0_7] : memref<16x128xf32, #tpu.memory_space<vmem>>, vector<16x128xf32>
      tpu.vector_store %arg3[%c0_6, %c0_7], %13 {strides = array<i32>} : memref<16x128xf32, #tpu.memory_space<vmem>>, vector<16x128xf32>,
    } else {
    }
    %c0 = arith.constant 0 : index
    %c0_1 = arith.constant 0 : index
    %3 = vector.load %arg1[%c0, %c0_1] : memref<16x128xf32, #tpu.memory_space<vmem>>, vector<16x128xf32>
    %c0_2 = arith.constant 0 : index
    %c0_3 = arith.constant 0 : index
    %4 = vector.load %arg2[%c0_2, %c0_3] : memref<16x128xf32, #tpu.memory_space<vmem>>, vector<16x128xf32>
    %5 = arith.subf %3, %4 : vector<16x128xf32>
    %6 = arith.mulf %5, %5 : vector<16x128xf32>
    %cst = arith.constant 9.99999997E-7 : f32
    %7 = vector.broadcast %cst : f32 to vector<16x128xf32>
    %8 = arith.addf %6, %7 : vector<16x128xf32>
    %9 = math.sqrt %8 : vector<16x128xf32>
    %c1_i32 = arith.constant 1 : i32
    %10 = arith.cmpi slt, %arg0, %c1_i32 : i32
    %11 = arith.extui %10 : i1 to i32
    %c0_i32_4 = arith.constant 0 : i32
    %12 = arith.cmpi ne, %11, %c0_i32_4 : i32
    scf.if %12 {
      %c0_5 = arith.constant 0 : index
      %c0_6 = arith.constant 0 : index
      %13 = vector.load %arg3[%c0_5, %c0_6] : memref<16x128xf32, #tpu.memory_space<vmem>>, vector<16x128xf32>
      %14 = vector.shape_cast %9 : vector<16x128xf32> to vector<1x16x128xf32>
      %cst_7 = arith.constant dense<0.000000e+00> : vector<16x128xf32>
      %15 = vector.multi_reduction <add>, %14, %cst_7 [0] : vector<1x16x128xf32> to vector<16x128xf32>
      %16 = arith.addf %13, %15 : vector<16x128xf32>
      %c0_8 = arith.constant 0 : index
      %c0_9 = arith.constant 0 : index
      %17 = vector.load %arg3[%c0_8, %c0_9] : memref<16x128xf32, #tpu.memory_space<vmem>>, vector<16x128xf32>
      tpu.vector_store %arg3[%c0_8, %c0_9], %16 {strides = array<i32>} : memref<16x128xf32, #tpu.memory_space<vmem>>, vector<16x128xf32>,
    } else {
    }
    return
  }
  func.func @transform_0(%arg0: i32) -> (i32, i32) {
    %c0_i32 = arith.constant 0 : i32
    %c0_i32_0 = arith.constant 0 : i32
    return %arg0, %c0_i32 : i32, i32
  }
  func.func @transform_1(%arg0: i32) -> (i32, i32) {
    %c0_i32 = arith.constant 0 : i32
    %c0_i32_0 = arith.constant 0 : i32
    return %arg0, %c0_i32 : i32, i32
  }
  func.func @transform_2(%arg0: i32) -> (i32, i32) {
    %c0_i32 = arith.constant 0 : i32
    %c0_i32_0 = arith.constant 0 : i32
    %c0_i32_1 = arith.constant 0 : i32
    return %c0_i32, %c0_i32_0 : i32, i32
  }
}

</mosaic_0001>

<llo_original>
// kernel: l1_charbonnier_loss.1
$region0: #{l1_charbonnier_loss.1}
  #allocation0 [shape = 'u32[]', space=smem, size = 0x4, offset = 0x4, fixed_abs, tag = 'smem constant byte address 0x4 - core index']
  #allocation1 [shape = 'u32[144,128]{1,0:T(1,128)}', space=vmem, size = 0x12000, scoped, tag = 'internal scratch']
  %s0 = inlined_call_operand.vmem [shape: f32[16,128], index: 0, kind: input, shape index: {}]
  %s1 = inlined_call_operand.vmem [shape: f32[16,128], index: 1, kind: input, shape index: {}]
  %s2 = inlined_call_operand.vmem [shape: f32[16,128], index: 2, kind: output, shape index: {}]
  %s3 = sld [smem:[#allocation0]]
  $region26: #{l1_charbonnier_loss.1} parent=0
    _
  %s5 = ssub.s32 1, %s3
  %s6 = scalar_select 0, %s5, %s3
  // Predicated region
  $region2: #{l1_charbonnier_loss.1} parent=0 // pred_check
    _
  $region3: #{l1_charbonnier_loss.1} parent=0 // pred_check_branch
    %8 = sbr.rel (0) target = $region5
  $region4: #{l1_charbonnier_loss.1} parent=0 // pred_region
    _
  $region5: #{l1_charbonnier_loss.1} parent=0 // pred_fallthru
    _
  // Predicated region
  $region6: #{l1_charbonnier_loss.1} parent=0 // pred_check
    _
  $region7: #{l1_charbonnier_loss.1} parent=0 // pred_check_branch
    %10 = sbr.rel (0) target = $region9
  $region8: #{l1_charbonnier_loss.1} parent=0 // pred_region
    _
  $region9: #{l1_charbonnier_loss.1} parent=0 // pred_fallthru
    _
  %p11 = scmp.eq.s32.totalorder 0, 0
  // Predicated region
  $region10: #{l1_charbonnier_loss.1} parent=0 // pred_check
    %p12 = pneg %p11
  $region11: #{l1_charbonnier_loss.1} parent=0 // pred_check_branch
    %14 = sbr.rel (%p12) target = $region13
  $region12: #{l1_charbonnier_loss.1} parent=0 // pred_region
    %15 = vst [vmem:[%s2] sm:$0xff] 0.0
    %16 = vst [vmem:[%s2 + $0x8] sm:$0xff] 0.0
  $region13: #{l1_charbonnier_loss.1} parent=0 // pred_fallthru
    _
  %v17 = vld [vmem:[%s0] sm:$0xff]
  %v18 = vld [vmem:[%s0 + $0x8] sm:$0xff]
  %v19 = vld [vmem:[%s1] sm:$0xff]
  %v20 = vld [vmem:[%s1 + $0x8] sm:$0xff]
  %v21 = vsub.f32 %v17, %v19
  %v22 = vsub.f32 %v18, %v20
  %v23 = vmul.f32 %v21, %v21
  %v24 = vmul.f32 %v22, %v22
  %v25 = vadd.f32 %v23, 1e-06
  %v26 = vadd.f32 %v24, 1e-06
  %v27 = vrsqrt.pop %v25
  %v28 = vmul.f32 %v25, %v27
  %vm29 = vcmp.eq.f32.partialorder %v25, inf
  %v30 = vsel %vm29, %v25, %v28
  %vm31 = vcmp.eq.f32.partialorder %v25, 0.0
  %v32 = vand.u32 %v25, 2147483648
  %v33 = vsel %vm31, %v32, %v30
  %v34 = vrsqrt.pop %v26
  %v35 = vmul.f32 %v26, %v34
  %vm36 = vcmp.eq.f32.partialorder %v26, inf
  %v37 = vsel %vm36, %v26, %v35
  %vm38 = vcmp.eq.f32.partialorder %v26, 0.0
  %v39 = vand.u32 %v26, 2147483648
  %v40 = vsel %vm38, %v39, %v37
  %p41 = scmp.lt.s32.totalorder 0, 1
  // Predicated region
  $region14: #{l1_charbonnier_loss.1} parent=0 // pred_check
    %p42 = pneg %p41
  $region15: #{l1_charbonnier_loss.1} parent=0 // pred_check_branch
    %44 = sbr.rel (%p42) target = $region17
  $region16: #{l1_charbonnier_loss.1} parent=0 // pred_region
    %v45 = vld [vmem:[%s2] sm:$0xff]
    %v46 = vld [vmem:[%s2 + $0x8] sm:$0xff]
    %v47 = vadd.f32 %v33, 0.0
    %v48 = vadd.f32 %v40, 0.0
    %v49 = vadd.f32 %v45, %v47
    %v50 = vadd.f32 %v46, %v48
    %51 = vst [vmem:[%s2] sm:$0xff] %v49
    %52 = vst [vmem:[%s2 + $0x8] sm:$0xff] %v50
  $region17: #{l1_charbonnier_loss.1} parent=0 // pred_fallthru
    _
  // Predicated region
  $region18: #{l1_charbonnier_loss.1} parent=0 // pred_check
    _
  $region19: #{l1_charbonnier_loss.1} parent=0 // pred_check_branch
    %54 = sbr.rel (0) target = $region21
  $region20: #{l1_charbonnier_loss.1} parent=0 // pred_region
    _
  $region21: #{l1_charbonnier_loss.1} parent=0 // pred_fallthru
    _
  // Predicated region
  $region22: #{l1_charbonnier_loss.1} parent=0 // pred_check
    _
  $region23: #{l1_charbonnier_loss.1} parent=0 // pred_check_branch
    %56 = sbr.rel (0) target = $region25
  $region24: #{l1_charbonnier_loss.1} parent=0 // pred_region
    _
  $region25: #{l1_charbonnier_loss.1} parent=0 // pred_fallthru
    _

</llo_original>
